<compile_context>
chip_gen: v7x
topology: tpu7x:2x2x1
jax: 0.10.0
libtpu: 0.0.40
codegen_flags: <defaults>
</compile_context>

<pallas_src>
import jax
import jax.numpy as jnp
from jax import lax
from jax.experimental import pallas as pl
from jax.experimental.pallas import tpu as pltpu


_DEFAULT_TILE_TOKENS = 1024      # tokens per grid step (multiple of 8)
_ONE_HOT_MAX_V = 2048            # one-hot MXU gather up to this vocab size
_MAX_OUT_TILE_BYTES = 4 << 20    # cap per-buffer output tile at ~4 MiB
_GATHER_BYTES_IN_FLIGHT = 64 << 10


def _round_up(x, m):
    return ((x + m - 1) // m) * m


def _choose_tile(n_tok, target, row_bytes):
    cap = max(8, (_MAX_OUT_TILE_BYTES // max(row_bytes, 1)) // 8 * 8)
    t = max(8, min(int(target), cap))
    t = (t // 8) * 8
    if n_tok <= t:
        return _round_up(n_tok, 8)          # single full-extent tile
    return t


# ---------------------------------------------------------------------------
# Path A: table resident in VMEM, gather as a one-hot MXU matmul.
# ---------------------------------------------------------------------------
def _make_onehot_kernel(t_tok, V, chunk=256):
    chunk = min(chunk, t_tok)

    def kernel(idx_ref, table_ref, out_ref):
        tab = table_ref[...]
        for c0 in range(0, t_tok, chunk):
            c = min(chunk, t_tok - c0)
            ids = jnp.clip(idx_ref[pl.ds(c0, c), :], 0, V - 1)        # (c, 1)
            one_hot = (lax.broadcasted_iota(jnp.int32, (c, V), 1) == ids
                       ).astype(tab.dtype)
            out_ref[pl.ds(c0, c), :] = jnp.dot(
                one_hot, tab, preferred_element_type=jnp.float32
            ).astype(out_ref.dtype)

    return kernel


# ---------------------------------------------------------------------------
# Path A2: table resident in VMEM, large V -> scalar gather, 8 rows per store.
# ---------------------------------------------------------------------------
def _make_scalar_gather_kernel(t_tok, V):
    def kernel(idx_ref, table_ref, out_ref, grp_ref):
        def group(g, carry):
            base = pl.multiple_of(g * 8, 8)
            for j in range(8):                       # static unroll
                row = jnp.clip(idx_ref[base + j], 0, V - 1)
                grp_ref[pl.ds(j, 1), :] = table_ref[pl.ds(row, 1), :]
            out_ref[pl.ds(base, 8), :] = grp_ref[...]   # unmasked (8, D) store
            return carry

        lax.fori_loop(0, t_tok // 8, group, 0)

    return kernel


# ---------------------------------------------------------------------------
# Path B: table in HBM; DMA rows directly into the output block, deep ring.
# ---------------------------------------------------------------------------
def _make_hbm_gather_kernel(t_tok, nbuf, V):
    def kernel(idx_ref, table_hbm, out_ref, sems):
        def start(t, row):
            pltpu.make_async_copy(
                table_hbm.at[pl.ds(row, 1), :],
                out_ref.at[pl.ds(t, 1), :],
                sems.at[t % nbuf],
            ).start()

        # Prime the ring with nbuf outstanding row fetches.
        for t in range(nbuf):
            start(t, jnp.clip(idx_ref[t], 0, V - 1))

        def body(t, carry):
            nxt = t + nbuf
            # Read the next id *before* the wait (wait breaks sst->sld fwd).
            nxt_row = jnp.clip(idx_ref[jnp.minimum(nxt, t_tok - 1)], 0, V - 1)
            pltpu.make_async_copy(                    # wait slot t
                table_hbm.at[pl.ds(0, 1), :],
                out_ref.at[pl.ds(0, 1), :],
                sems.at[t % nbuf],
            ).wait()

            @pl.when(nxt < t_tok)
            def _():
                start(nxt, nxt_row)

            return carry

        lax.fori_loop(0, t_tok, body, 0)

    return kernel


def german_embedder(x, table, *, tile_tokens=_DEFAULT_TILE_TOKENS, mode="auto"):
    """out[b, s] = table[x[b, s]]  (nn.Embedding forward).

    Args:
      x:     (B, S) integer token ids.
      table: (V, D) embedding table.
      mode:  "auto" | "onehot" | "scalar" | "hbm" (forcing is for testing).

    Returns:
      (B, S, D) embeddings, table.dtype.
    """
    B, S = x.shape
    V, D = table.shape
    dtype = table.dtype
    itemsize = jnp.dtype(dtype).itemsize
    row_bytes = D * itemsize
    n_tok = B * S

    # Ids clamped in-kernel; only flatten/cast here (no extra clip pass).
    ids = x.reshape(n_tok).astype(jnp.int32)

    t_tok = _choose_tile(n_tok, tile_tokens, row_bytes)
    n_pad = _round_up(n_tok, t_tok)
    if n_pad != n_tok:
        ids = jnp.pad(ids, (0, n_pad - n_tok))       # padded ids gather row 0
    n_tiles = n_pad // t_tok

    # --- generation-aware VMEM budget ---------------------------------------
    try:
        vmem_cap = int(pltpu.get_tpu_info().vmem_capacity_bytes)
    except Exception:
        kind = ""
        try:
            kind = jax.devices()[0].device_kind.lower()
        except Exception:
            pass
        vmem_cap = (64 << 20) if "v7" in kind else (128 << 20)

    table_bytes = V * D * itemsize
    out_tile_bytes = t_tok * row_bytes
    ids_vmem_tile_bytes = t_tok * 128 * 4   # (t_tok, 1) block pads lanes to 128
    slack = 8 << 20

    # Resident table is double-buffered by the default pipeline -> count 2x.
    resident_need = (2 * table_bytes + 2 * out_tile_bytes
                     + 2 * ids_vmem_tile_bytes + slack)
    frac = 0.70 if vmem_cap >= (96 << 20) else 0.55   # 128 MiB parts vs v7x
    fits_resident = resident_need <= frac * vmem_cap

    if mode == "auto":
        if fits_resident and V <= _ONE_HOT_MAX_V:
            mode = "onehot"
        elif fits_resident:
            mode = "scalar"
        else:
            mode = "hbm"

    out_spec = pl.BlockSpec((t_tok, D), lambda i: (i, 0))

    if mode == "onehot":
        ids_arr = ids.reshape(n_pad, 1)
        kernel = _make_onehot_kernel(t_tok, V)
        in_specs = [pl.BlockSpec((t_tok, 1), lambda i: (i, 0)),
                    pl.BlockSpec((V, D), lambda i: (0, 0))]
        scratch = []
        vmem_need = resident_need
    elif mode == "scalar":
        ids_arr = ids
        kernel = _make_scalar_gather_kernel(t_tok, V)
        in_specs = [pl.BlockSpec((t_tok,), lambda i: (i,),
                                 memory_space=pltpu.MemorySpace.SMEM),
                    pl.BlockSpec((V, D), lambda i: (0, 0))]
        scratch = [pltpu.VMEM((8, D), dtype)]
        vmem_need = 2 * table_bytes + 2 * out_tile_bytes + 8 * row_bytes + slack
    elif mode == "hbm":
        ids_arr = ids
        nbuf = max(8, min(64, _GATHER_BYTES_IN_FLIGHT // max(row_bytes, 1)))
        nbuf = min(nbuf, t_tok)
        kernel = _make_hbm_gather_kernel(t_tok, nbuf, V)
        in_specs = [pl.BlockSpec((t_tok,), lambda i: (i,),
                                 memory_space=pltpu.MemorySpace.SMEM),
                    pl.BlockSpec(memory_space=pl.ANY)]
        scratch = [pltpu.SemaphoreType.DMA((nbuf,))]
        vmem_need = 2 * out_tile_bytes + slack
    else:
        raise ValueError(f"unknown mode: {mode!r}")

    # Always set an explicit scoped-VMEM limit (v5e default is only ~16 MiB).
    vmem_limit = int(min(0.92 * vmem_cap, max(vmem_need, 32 << 20)))

    cost = pl.CostEstimate(
        flops=0,
        transcendentals=0,
        bytes_accessed=2 * n_tok * row_bytes + n_tok * 4,
    )

    out_flat = pl.pallas_call(
        kernel,
        out_shape=jax.ShapeDtypeStruct((n_pad, D), dtype),
        grid_spec=pltpu.PrefetchScalarGridSpec(
            num_scalar_prefetch=0,
            grid=(n_tiles,),
            in_specs=in_specs,
            out_specs=out_spec,
            scratch_shapes=scratch,
        ),
        compiler_params=pltpu.CompilerParams(
            dimension_semantics=("parallel",),   # token tiles are independent
            vmem_limit_bytes=vmem_limit,
        ),
        cost_estimate=cost,
    )(ids_arr, table)

    out = out_flat if n_pad == n_tok else out_flat[:n_tok]
    return out.reshape(B, S, D)


if __name__ == "__main__":
    # Small, forward-consistent shapes (GermanEmbedder: ids -> (B, S, D)).
    vocab_size = 32
    dim_model = 128
    batch = 2
    seq = 8

    key = jax.random.PRNGKey(0)
    k_tab, k_idx = jax.random.split(key)

    # Deterministic synthetic embedding table (stands in for emb/ger.npy).
    table = jax.random.normal(k_tab, (vocab_size, dim_model), dtype=jnp.float32)
    # Integer token ids (the .long() cast in the PyTorch forward).
    x = jax.random.randint(k_idx, (batch, seq), 0, vocab_size, dtype=jnp.int32)

    ref = jnp.take(table, x, axis=0)

    # Auto path (small vocab -> VMEM-resident table, one-hot MXU gather).
    out_auto = jax.block_until_ready(german_embedder(x, table))
    assert out_auto.shape == (batch, seq, dim_model)
    assert jnp.allclose(out_auto, ref), "one-hot MXU gather mismatch"

    # Resident-table scalar gather path (large-V, table-fits-VMEM fallback).
    out_scalar = jax.block_until_ready(german_embedder(x, table, mode="scalar"))
    assert jnp.allclose(out_scalar, ref), "scalar grouped-store gather mismatch"

    # HBM DMA-gather path (very large vocab fallback), forced for validation.
    out_hbm = jax.block_until_ready(german_embedder(x, table, mode="hbm"))
    assert jnp.allclose(out_hbm, ref), "HBM DMA-gather mismatch"

    print("KERNEL_OK")
</pallas_src>

<mosaic_0001>
module attributes {stable_mosaic.version = 11 : i64} {
  func.func @kernel(%arg0: i32, %arg1: memref<16x1xi32, #tpu.memory_space<vmem>>, %arg2: memref<32x128xf32, #tpu.memory_space<vmem>>, %arg3: memref<16x128xf32, #tpu.memory_space<vmem>>) attributes {dimension_semantics = [#tpu.dimension_semantics<parallel>], iteration_bounds = array<i64: 1>, scalar_prefetch = 0 : i64, scratch_operands = 0 : i64, tpu.core_type = #tpu.core_type<tc>, window_params = [{transform_indices = @transform_0, window_bounds = array<i64: 16, 1>}, {pipeline_mode = #tpu.pipeline_mode<synchronous>, transform_indices = @transform_1, window_bounds = array<i64: 32, 128>}, {transform_indices = @transform_2, window_bounds = array<i64: 16, 128>}]} {
    %c0 = arith.constant 0 : index
    %c0_0 = arith.constant 0 : index
    %0 = vector.load %arg2[%c0, %c0_0] : memref<32x128xf32, #tpu.memory_space<vmem>>, vector<32x128xf32>
    %c0_1 = arith.constant 0 : index
    %c0_2 = arith.constant 0 : index
    %1 = vector.load %arg1[%c0_1, %c0_2] : memref<16x1xi32, #tpu.memory_space<vmem>>, vector<16x1xi32>
    %c0_i32 = arith.constant 0 : i32
    %c31_i32 = arith.constant 31 : i32
    %2 = vector.broadcast %c0_i32 : i32 to vector<16x1xi32>
    %3 = arith.maxsi %2, %1 : vector<16x1xi32>
    %4 = vector.broadcast %c31_i32 : i32 to vector<16x1xi32>
    %5 = arith.minsi %4, %3 : vector<16x1xi32>
    %6 = tpu.iota {dimensions = array<i32: 1>} : vector<16x32xi32>
    %7 = vector.broadcast %5 : vector<16x1xi32> to vector<16x32xi32>
    %8 = arith.cmpi eq, %6, %7 : vector<16x32xi32>
    %9 = arith.extui %8 : vector<16x32xi1> to vector<16x32xi32>
    %10 = arith.sitofp %9 : vector<16x32xi32> to vector<16x32xf32>
    %cst = arith.constant dense<0.000000e+00> : vector<16x128xf32>
    %11 = tpu.matmul %10, %0, %cst {dimension_numbers = #tpu.dot_dimension_numbers<[1], [0], [0], [1], [0, 0, 1, 1], [], []>} : vector<16x32xf32>, vector<32x128xf32>, vector<16x128xf32> -> vector<16x128xf32>
    %c0_3 = arith.constant 0 : index
    %c0_4 = arith.constant 0 : index
    %12 = vector.load %arg3[%c0_3, %c0_4] : memref<16x128xf32, #tpu.memory_space<vmem>>, vector<16x128xf32>
    tpu.vector_store %arg3[%c0_3, %c0_4], %11 {strides = array<i32>} : memref<16x128xf32, #tpu.memory_space<vmem>>, vector<16x128xf32>,
    return
  }
  func.func @transform_0(%arg0: i32) -> (i32, i32) {
    %c0_i32 = arith.constant 0 : i32
    %c0_i32_0 = arith.constant 0 : i32
    return %arg0, %c0_i32 : i32, i32
  }
  func.func @transform_1(%arg0: i32) -> (i32, i32) {
    %c0_i32 = arith.constant 0 : i32
    %c0_i32_0 = arith.constant 0 : i32
    %c0_i32_1 = arith.constant 0 : i32
    return %c0_i32, %c0_i32_0 : i32, i32
  }
  func.func @transform_2(%arg0: i32) -> (i32, i32) {
    %c0_i32 = arith.constant 0 : i32
    %c0_i32_0 = arith.constant 0 : i32
    return %arg0, %c0_i32 : i32, i32
  }
}

</mosaic_0001>

<llo_original>
// kernel: tpu_custom_call.1
$region0: #{tpu_custom_call.1}
  #allocation0 [shape = 'u32[]', space=smem, size = 0x4, offset = 0x4, fixed_abs, tag = 'smem constant byte address 0x4 - core index']
  #allocation1 [shape = 'u32[144,128]{1,0:T(1,128)}', space=vmem, size = 0x12000, scoped, tag = 'internal scratch']
  %s0 = inlined_call_operand.vmem [shape: s32[16,1], index: 0, kind: input, shape index: {}]
  %s1 = inlined_call_operand.hbm [shape: f32[32,128], index: 1, kind: input, shape index: {}]
  %s2 = inlined_call_operand.hbm [shape: f32[16,128], index: 2, kind: output, shape index: {}]
  %s3 = sld [smem:[#allocation0]]
  $region22: #{tpu_custom_call.1} parent=0
    _
  %s5 = ssub.s32 1, %s3
  %s6 = scalar_select 0, %s5, %s3
  $region1: #{tpu_custom_call.1} parent=0
    #allocation2 [shape = 'u8[16384]{0}', space=vmem, size = 0x4000, scoped, tag = 'input window, operand 1, single buffered']
    #allocation3 [shape = 's32[1]{0}', space=sflag, size = 0x4, scoped, tag = 'scoped memory for tpu_custom_call.1']
    #allocation4 [shape = 's32[1]{0}', space=sflag, size = 0x4, scoped, tag = 'scoped memory for tpu_custom_call.1']
    #allocation5 [shape = 'u8[8192]{0}', space=vmem, size = 0x2000, scoped, tag = 'output window, operand 0, single buffered']
    %7 = vsyncpa [#allocation3], 0
    %8 = vsyncpa [#allocation4], 0
    // Predicated region
    $region2: #{tpu_custom_call.1} parent=1 // pred_check
      _
    $region3: #{tpu_custom_call.1} parent=1 // pred_check_branch
      %10 = sbr.rel (0) target = $region5
    $region4: #{tpu_custom_call.1} parent=1 // pred_region
      _
    $region5: #{tpu_custom_call.1} parent=1 // pred_fallthru
      _
    // Predicated region
    $region6: #{tpu_custom_call.1} parent=1 // pred_check
      _
    $region7: #{tpu_custom_call.1} parent=1 // pred_check_branch
      %12 = sbr.rel (0) target = $region9
    $region8: #{tpu_custom_call.1} parent=1 // pred_region
      %s14 = ssub.s32 512, 512
      %15 = vsyncadd [#allocation3], %s14
      %s16 = sshll.u32 [#allocation2], 4
      %s17 = int_to_ptr.vmem [resolvable:$true] %s16
      %22 = dma.hbm_to_vmem [thread:$0]  %s1, 512, %s17, [#allocation3], 128, 128, 8
    $region9: #{tpu_custom_call.1} parent=1 // pred_fallthru
      _
    // Predicated region
    $region10: #{tpu_custom_call.1} parent=1 // pred_check
      _
    $region11: #{tpu_custom_call.1} parent=1 // pred_check_branch
      %24 = sbr.rel (0) target = $region13
    $region12: #{tpu_custom_call.1} parent=1 // pred_region
      %25 = dma.done [#allocation3], 512
    $region13: #{tpu_custom_call.1} parent=1 // pred_fallthru
      _
    %v26 = vld [vmem:[#allocation2] sm:$0xff]
    %v27 = vld [vmem:[#allocation2 + $0x8] sm:$0xff]
    %v28 = vld [vmem:[#allocation2 + $0x10] sm:$0xff]
    %v29 = vld [vmem:[#allocation2 + $0x18] sm:$0xff]
    %v30 = vld [vmem:[%s0] sm:$0xff]
    %v31 = vld [vmem:[%s0 + $0x8] sm:$0xff]
    %vm32 = vcmp.gt.s32.totalorder %v30, 0
    %v33 = vsel %vm32, %v30, 0
    %vm34 = vcmp.gt.s32.totalorder %v31, 0
    %v35 = vsel %vm34, %v31, 0
    %vm36 = vcmp.lt.s32.totalorder %v33, 31
    %v37 = vsel %vm36, %v33, 31
    %vm38 = vcmp.lt.s32.totalorder %v35, 31
    %v39 = vsel %vm38, %v35, 31
    %v40 = vlaneseq
    %v41 = vand.u32 %v40, 127
    %42 = vset.pattern.permute.xlu0 0
    %43 = vperm.xlu0 %42, %v37
    %v44 = vpop.permute.xlu0 %43
    %45 = vset.pattern.permute.xlu0 0
    %46 = vperm.xlu0 %45, %v39
    %v47 = vpop.permute.xlu0 %46
    %vm48 = vcmp.eq.s32.totalorder %v41, %v44
    %vm49 = vcmp.eq.s32.totalorder %v41, %v47
    %v50 = vsel %vm48, 1, 0
    %v51 = vsel %vm49, 1, 0
    %v52 = vcvt.s32.f32 %v50
    %v53 = vcvt.s32.f32 %v51
    %vm54 = vcmask 261120
    %v56 = vsel %vm54, %v52, 0
    %v59 = vsel %vm54, %v53, 0
    %61 = vmatprep.subr.mxu0 0.0
    %62 = vmatpush1.msra.mxu0 %v26
    %63 = vmatprep.subr.mxu0 0.0
    %64 = vmatpush1.msra.mxu0 %v27
    %65 = vmatprep.subr.mxu0 0.0
    %66 = vmatpush1.msra.mxu0 %v28
    %67 = vmatprep.subr.mxu0 0.0
    %68 = vmatpush1.msra.mxu0 %v29
    %69 = vmatprep.subr.mxu0 0.0
    %70 = vmatpush1.msra.mxu0 0.0
    %71 = vmatprep.subr.mxu0 0.0
    %72 = vmatpush1.msra.mxu0 0.0
    %73 = vmatprep.subr.mxu0 0.0
    %74 = vmatpush1.msra.mxu0 0.0
    %75 = vmatprep.subr.mxu0 0.0
    %76 = vmatpush1.msra.mxu0 0.0
    %77 = vmatprep.subr.mxu0 0.0
    %78 = vmatpush1.msra.mxu0 0.0
    %79 = vmatprep.subr.mxu0 0.0
    %80 = vmatpush1.msra.mxu0 0.0
    %81 = vmatprep.subr.mxu0 0.0
    %82 = vmatpush1.msra.mxu0 0.0
    %83 = vmatprep.subr.mxu0 0.0
    %84 = vmatpush1.msra.mxu0 0.0
    %85 = vmatprep.subr.mxu0 0.0
    %86 = vmatpush1.msra.mxu0 0.0
    %87 = vmatprep.subr.mxu0 0.0
    %88 = vmatpush1.msra.mxu0 0.0
    %89 = vmatprep.subr.mxu0 0.0
    %90 = vmatpush1.msra.mxu0 0.0
    %91 = vmatprep.subr.mxu0 0.0
    %92 = vmatpush1.msra.mxu0 0.0
    %93 = vmatprep.subr.mxu0 0.0
    %94 = vmatpush1.msra.mxu0 0.0
    %95 = vmatprep.subr.mxu0 0.0
    %96 = vmatpush1.msra.mxu0 0.0
    %97 = vmatprep.subr.mxu0 0.0
    %98 = vmatpush1.msra.mxu0 0.0
    %99 = vmatprep.subr.mxu0 0.0
    %100 = vmatpush1.msra.mxu0 0.0
    %101 = vmatprep.subr.mxu0 0.0
    %102 = vmatpush1.msra.mxu0 0.0
    %103 = vmatprep.subr.mxu0 0.0
    %104 = vmatpush1.msra.mxu0 0.0
    %105 = vmatprep.subr.mxu0 0.0
    %106 = vmatpush1.msra.mxu0 0.0
    %107 = vmatprep.subr.mxu0 0.0
    %108 = vmatpush1.msra.mxu0 0.0
    %109 = vmatprep.subr.mxu0 0.0
    %110 = vmatpush1.msra.mxu0 0.0
    %111 = vmatprep.subr.mxu0 0.0
    %112 = vmatpush1.msra.mxu0 0.0
    %113 = vmatprep.subr.mxu0 0.0
    %114 = vmatpush1.msra.mxu0 0.0
    %115 = vmatprep.subr.mxu0 0.0
    %116 = vmatpush1.msra.mxu0 0.0
    %117 = vmatprep.subr.mxu0 0.0
    %118 = vmatpush1.msra.mxu0 0.0
    %119 = vmatprep.subr.mxu0 0.0
    %120 = vmatpush1.msra.mxu0 0.0
    %121 = vmatprep.subr.mxu0 0.0
    %122 = vmatpush1.msra.mxu0 0.0
    %123 = vmatprep.subr.mxu0 0.0
    %124 = vmatpush1.msra.mxu0 0.0
    %125 = vmatprep.mubr.f32.mxu0 0.0
    %126 = vmatmul.mubr.f32.gmra.mrb[0].mxu0 %v56
    %v127 = vpop.f32.mrb[0].mxu0
    %v128 = vadd.f32 0.0, %v127
    %v129 = vpop.f32.mrb[0].mxu0
    %130 = vmatprep.mubr.f32.mxu0 0.0
    %131 = vmatmul.mubr.f32.gmra.mrb[0].mxu0 %v59
    %v132 = vpop.f32.mrb[0].mxu0
    %v133 = vadd.f32 0.0, %v132
    %v134 = vpop.f32.mrb[0].mxu0
    %135 = vdwg.mxu0
    %136 = vst [vmem:[#allocation5] sm:$0xff] %v128
    %137 = vst [vmem:[#allocation5 + $0x8] sm:$0xff] %v133
    // Predicated region
    $region14: #{tpu_custom_call.1} parent=1 // pred_check
      _
    $region15: #{tpu_custom_call.1} parent=1 // pred_check_branch
      %139 = sbr.rel (0) target = $region17
    $region16: #{tpu_custom_call.1} parent=1 // pred_region
      %s141 = ssub.s32 256, 256
      %142 = vsyncadd [#allocation4], %s141
      %s143 = sshll.u32 [#allocation5], 4
      %s144 = int_to_ptr.vmem [resolvable:$true] %s143
      %149 = dma.vmem_to_hbm [thread:$0]  %s144, 256, %s2, [#allocation4], 128, 128, 8
    $region17: #{tpu_custom_call.1} parent=1 // pred_fallthru
      _
    // Predicated region
    $region18: #{tpu_custom_call.1} parent=1 // pred_check
      _
    $region19: #{tpu_custom_call.1} parent=1 // pred_check_branch
      %151 = sbr.rel (0) target = $region21
    $region20: #{tpu_custom_call.1} parent=1 // pred_region
      %152 = dma.done [#allocation4], 256
    $region21: #{tpu_custom_call.1} parent=1 // pred_fallthru
      _
    %153 = vsyncpa [#allocation3], 1
    %154 = vsyncpa [#allocation4], 1

</llo_original>
